<compile_context>
chip_gen: v5e
topology: v5e:2x2
jax: 0.10.0
libtpu: 0.0.40
codegen_flags: <defaults>
</compile_context>

<pallas_src>
import numpy as np
import jax
import jax.numpy as jnp
from jax.experimental import pallas as pl
from jax.experimental.pallas import tpu as pltpu

EPS = 1e-5  # PyTorch BatchNorm2d default eps


# ----------------------------------------------------------------------------
# Fused kernel: maxpool(2) -> conv3x3+BN+ReLU -> conv3x3+BN+ReLU (one batch elem)
# ----------------------------------------------------------------------------
def _down_block_kernel(x_ref, b1_ref, s1_ref, t1_ref, b2_ref, s2_ref, t2_ref,
                       o_ref, xpad1, xpad2):
    # x_ref : (1, H, 4*W*Cin)  quadrant-packed full-res input, one batch element
    #         lane index ((a*2+b)*W + w)*Cin + c  <->  input pixel (2h+a, 2w+b, c)
    # b1_ref: (3, W*Cin,  W*Cout) banded conv1 weights (W-padding folded in)
    # b2_ref: (3, W*Cout, W*Cout) banded conv2 weights (W-padding folded in)
    # s*/t* : (1, W*Cout)  eval-BN + bias folded scale/shift, tiled across W
    # xpad1 : (H+2, W*Cin)  scratch: row-padded pooled activation
    # xpad2 : (H+2, W*Cout) scratch: row-padded conv1 activation
    H = o_ref.shape[1]
    WCi = xpad1.shape[1]          # W * Cin
    WCo = o_ref.shape[2]          # W * Cout

    # ---- MaxPool2d(2): reduce over the 4 lane-packed quadrants ---------------
    x = x_ref[0]                                        # (H, 4*W*Cin)
    m = jnp.maximum(x[:, :2 * WCi], x[:, 2 * WCi:])     # max over row offset a
    pooled = jnp.maximum(m[:, :WCi], m[:, WCi:])        # max over col offset b
    #   pooled[h, w*Cin + c] == maxpool2x2(input)[h, w, c]

    # ---- conv1 3x3 (pad=1) + BN + ReLU ---------------------------------------
    # H-direction zero padding via two zero rows in the scratch; W-direction
    # padding is already baked into the banded weight matrices.
    xpad1[0:1, :] = jnp.zeros((1, WCi), jnp.float32)
    xpad1[H + 1:H + 2, :] = jnp.zeros((1, WCi), jnp.float32)
    xpad1[1:H + 1, :] = pooled
    acc = jnp.dot(xpad1[0:H, :], b1_ref[0], preferred_element_type=jnp.float32)
    for dy in (1, 2):
        acc = acc + jnp.dot(xpad1[dy:dy + H, :], b1_ref[dy],
                            preferred_element_type=jnp.float32)
    h1 = jnp.maximum(acc * s1_ref[...] + t1_ref[...], 0.0)   # (H, W*Cout)

    # ---- conv2 3x3 (pad=1) + BN + ReLU ---------------------------------------
    xpad2[0:1, :] = jnp.zeros((1, WCo), jnp.float32)
    xpad2[H + 1:H + 2, :] = jnp.zeros((1, WCo), jnp.float32)
    xpad2[1:H + 1, :] = h1
    acc2 = jnp.dot(xpad2[0:H, :], b2_ref[0], preferred_element_type=jnp.float32)
    for dy in (1, 2):
        acc2 = acc2 + jnp.dot(xpad2[dy:dy + H, :], b2_ref[dy],
                              preferred_element_type=jnp.float32)
    out = jnp.maximum(acc2 * s2_ref[...] + t2_ref[...], 0.0)

    # Dropout2d(p=0.3) is identity in eval mode.
    o_ref[0] = out.astype(o_ref.dtype)


# ----------------------------------------------------------------------------
# Wrapper-side parameter / layout preparation (runs once per call under jit)
# ----------------------------------------------------------------------------
def _pack_input_quadrants(x_nchw):
    # (N, Cin, 2H, 2W) -> (N, H, 4*W*Cin) with
    #   Q[n, h, ((a*2+b)*W + w)*Cin + c] = x[n, c, 2h+a, 2w+b]
    N, Cin, H2, W2 = x_nchw.shape
    H, W = H2 // 2, W2 // 2
    x = x_nchw.reshape(N, Cin, H, 2, W, 2)        # (n, c, h, a, w, b)
    x = jnp.transpose(x, (0, 2, 3, 5, 4, 1))      # (n, h, a, b, w, c)
    return x.reshape(N, H, 4 * W * Cin)


def _band_weights(w_oihw, W):
    # PyTorch (Cout, Cin, 3, 3) -> (3, W*Cin, W*Cout) banded matrices B[dy] with
    #   B[dy][(w + dx - 1)*Cin + c, w*Cout + o] = w[o, c, dy, dx]
    # (entries with w+dx-1 outside [0, W) are zero == width-direction zero pad).
    Cout, Cin, _, _ = w_oihw.shape
    core = jnp.transpose(w_oihw, (2, 3, 1, 0)).astype(jnp.float32)  # (dy, dx, c, o)
    wi = jnp.arange(W)[:, None]     # input column index
    wo = jnp.arange(W)[None, :]     # output column index
    band = jnp.zeros((3, W, Cin, W, Cout), jnp.float32)
    for dx in range(3):
        mask = ((wi - wo) == (dx - 1)).astype(jnp.float32)          # (W, W)
        band = band + mask[None, :, None, :, None] * core[:, dx][:, None, :, None, :]
    return band.reshape(3, W * Cin, W * Cout)


def _fold_bn(conv_b, gamma, beta, mean, var, W):
    s = gamma / jnp.sqrt(var + EPS)
    t = (conv_b - mean) * s + beta
    Cout = s.shape[0]
    # tile across W -> packed (1, W*Cout): lane w*Cout + o gets s[o] / t[o]
    return jnp.tile(s, W).reshape(1, W * Cout), jnp.tile(t, W).reshape(1, W * Cout)


# ----------------------------------------------------------------------------
# DownBlock forward (Pallas path)
# ----------------------------------------------------------------------------
def down_block_forward(x_nchw, p):
    N, Cin, H2, W2 = x_nchw.shape
    H, W = H2 // 2, W2 // 2
    Cout = p["conv1_w"].shape[0]
    WCi, WCo = W * Cin, W * Cout

    xq = _pack_input_quadrants(x_nchw)                    # (N, H, 4*W*Cin)
    b1 = _band_weights(p["conv1_w"], W)                   # (3, W*Cin,  W*Cout)
    b2 = _band_weights(p["conv2_w"], W)                   # (3, W*Cout, W*Cout)
    s1, t1 = _fold_bn(p["conv1_b"], p["bn1_gamma"], p["bn1_beta"],
                      p["bn1_mean"], p["bn1_var"], W)
    s2, t2 = _fold_bn(p["conv2_b"], p["bn2_gamma"], p["bn2_beta"],
                      p["bn2_mean"], p["bn2_var"], W)

    out_packed = pl.pallas_call(
        _down_block_kernel,
        out_shape=jax.ShapeDtypeStruct((N, H, WCo), jnp.float32),
        grid_spec=pltpu.PrefetchScalarGridSpec(
            num_scalar_prefetch=0,
            grid=(N,),
            in_specs=[
                pl.BlockSpec((1, H, 4 * WCi), lambda n: (n, 0, 0)),
                pl.BlockSpec((3, WCi, WCo), lambda n: (0, 0, 0)),
                pl.BlockSpec((1, WCo), lambda n: (0, 0)),
                pl.BlockSpec((1, WCo), lambda n: (0, 0)),
                pl.BlockSpec((3, WCo, WCo), lambda n: (0, 0, 0)),
                pl.BlockSpec((1, WCo), lambda n: (0, 0)),
                pl.BlockSpec((1, WCo), lambda n: (0, 0)),
            ],
            out_specs=pl.BlockSpec((1, H, WCo), lambda n: (n, 0, 0)),
            scratch_shapes=[
                pltpu.VMEM((H + 2, WCi), jnp.float32),
                pltpu.VMEM((H + 2, WCo), jnp.float32),
            ],
        ),
        compiler_params=pltpu.CompilerParams(
            dimension_semantics=("parallel",),
            vmem_limit_bytes=32 * 1024 * 1024),
    )(xq, b1, s1, t1, b2, s2, t2)

    out = out_packed.reshape(N, H, W, Cout)               # free (row-major) unpack
    return jnp.transpose(out, (0, 3, 1, 2))               # NHWC -> NCHW boundary


# ----------------------------------------------------------------------------
# Parameters (deterministic synthetic init, PyTorch weight conventions)
# ----------------------------------------------------------------------------
def init_params(key, in_channels, out_channels):
    Ci, Co = in_channels, out_channels
    ks = jax.random.split(key, 6)

    def nrm(k, shape, scale):
        return jax.random.normal(k, shape, jnp.float32) * scale

    p = {}
    p["conv1_w"] = nrm(ks[0], (Co, Ci, 3, 3), 0.15)   # Conv2d: (Cout, Cin, kH, kW)
    p["conv1_b"] = nrm(ks[1], (Co,), 0.1)
    p["conv2_w"] = nrm(ks[2], (Co, Co, 3, 3), 0.15)
    p["conv2_b"] = nrm(ks[3], (Co,), 0.1)
    # BatchNorm2d (eval mode): affine params + running stats
    p["bn1_gamma"] = 1.0 + 0.1 * jax.random.normal(ks[4], (Co,), jnp.float32)
    p["bn1_beta"] = jnp.linspace(-0.1, 0.1, Co).astype(jnp.float32)
    p["bn1_mean"] = jnp.linspace(-0.05, 0.05, Co).astype(jnp.float32)
    p["bn1_var"] = jnp.linspace(0.5, 1.5, Co).astype(jnp.float32)
    p["bn2_gamma"] = 1.0 + 0.1 * jax.random.normal(ks[5], (Co,), jnp.float32)
    p["bn2_beta"] = jnp.linspace(0.1, -0.1, Co).astype(jnp.float32)
    p["bn2_mean"] = jnp.linspace(0.05, -0.05, Co).astype(jnp.float32)
    p["bn2_var"] = jnp.linspace(1.5, 0.5, Co).astype(jnp.float32)
    return p


# ----------------------------------------------------------------------------
# Pure-JAX reference (same eval-mode semantics) for validation
# ----------------------------------------------------------------------------
def ref_forward(x_nchw, p):
    x = jnp.transpose(x_nchw, (0, 2, 3, 1))               # NCHW -> NHWC
    x = jax.lax.reduce_window(x, -jnp.inf, jax.lax.max,
                              window_dimensions=(1, 2, 2, 1),
                              window_strides=(1, 2, 2, 1),
                              padding="VALID")

    def conv_bn_relu(z, w, b, gamma, beta, mean, var):
        w_hwio = jnp.transpose(w, (2, 3, 1, 0))
        out = jax.lax.conv_general_dilated(
            z, w_hwio, window_strides=(1, 1), padding="SAME",
            dimension_numbers=("NHWC", "HWIO", "NHWC"),
            precision=jax.lax.Precision.HIGHEST) + b
        out = (out - mean) / jnp.sqrt(var + EPS) * gamma + beta
        return jnp.maximum(out, 0.0)

    h = conv_bn_relu(x, p["conv1_w"], p["conv1_b"],
                     p["bn1_gamma"], p["bn1_beta"], p["bn1_mean"], p["bn1_var"])
    h = conv_bn_relu(h, p["conv2_w"], p["conv2_b"],
                     p["bn2_gamma"], p["bn2_beta"], p["bn2_mean"], p["bn2_var"])
    return jnp.transpose(h, (0, 3, 1, 2))


if __name__ == "__main__":
    key = jax.random.PRNGKey(0)
    kx, kp = jax.random.split(key)

    # DownBlock(in_channels, out_channels=8, is_first=False): input channels are
    # overridden to out_channels // 2 = 4 and a MaxPool2d(2) is applied first.
    N = 2
    out_channels = 8
    in_channels = out_channels // 2
    H2 = W2 = 32                       # pre-pool spatial -> 16x16 after pooling
    x = jax.random.normal(kx, (N, in_channels, H2, W2), jnp.float32)
    params = init_params(kp, in_channels, out_channels)

    out = jax.block_until_ready(jax.jit(down_block_forward)(x, params))
    ref = jax.block_until_ready(ref_forward(x, params))

    assert out.shape == (N, out_channels, H2 // 2, W2 // 2), out.shape
    if not np.allclose(np.asarray(out), np.asarray(ref), rtol=2e-3, atol=2e-3):
        max_err = float(np.max(np.abs(np.asarray(out) - np.asarray(ref))))
        raise AssertionError(f"mismatch vs reference, max abs err {max_err}")

    print("KERNEL_OK")
</pallas_src>

<mosaic_0001>
module attributes {stable_mosaic.version = 11 : i64} {
  func.func @_down_block_kernel(%arg0: i32, %arg1: memref<1x16x256xf32, #tpu.memory_space<vmem>>, %arg2: memref<3x64x128xf32, #tpu.memory_space<vmem>>, %arg3: memref<1x128xf32, #tpu.memory_space<vmem>>, %arg4: memref<1x128xf32, #tpu.memory_space<vmem>>, %arg5: memref<3x128x128xf32, #tpu.memory_space<vmem>>, %arg6: memref<1x128xf32, #tpu.memory_space<vmem>>, %arg7: memref<1x128xf32, #tpu.memory_space<vmem>>, %arg8: memref<1x16x128xf32, #tpu.memory_space<vmem>>, %arg9: memref<18x64xf32, #tpu.memory_space<vmem>>, %arg10: memref<18x128xf32, #tpu.memory_space<vmem>>) attributes {dimension_semantics = [#tpu.dimension_semantics<parallel>], iteration_bounds = array<i64: 2>, scalar_prefetch = 0 : i64, scratch_operands = 2 : i64, tpu.core_type = #tpu.core_type<tc>, window_params = [{transform_indices = @transform_0, window_bounds = array<i64: 1, 16, 256>}, {pipeline_mode = #tpu.pipeline_mode<synchronous>, transform_indices = @transform_1, window_bounds = array<i64: 3, 64, 128>}, {pipeline_mode = #tpu.pipeline_mode<synchronous>, transform_indices = @transform_2, window_bounds = array<i64: 1, 128>}, {pipeline_mode = #tpu.pipeline_mode<synchronous>, transform_indices = @transform_3, window_bounds = array<i64: 1, 128>}, {pipeline_mode = #tpu.pipeline_mode<synchronous>, transform_indices = @transform_4, window_bounds = array<i64: 3, 128, 128>}, {pipeline_mode = #tpu.pipeline_mode<synchronous>, transform_indices = @transform_5, window_bounds = array<i64: 1, 128>}, {pipeline_mode = #tpu.pipeline_mode<synchronous>, transform_indices = @transform_6, window_bounds = array<i64: 1, 128>}, {transform_indices = @transform_7, window_bounds = array<i64: 1, 16, 128>}]} {
    %c0 = arith.constant 0 : index
    %c0_0 = arith.constant 0 : index
    %c0_1 = arith.constant 0 : index
    %0 = vector.load %arg1[%c0, %c0_0, %c0_1] : memref<1x16x256xf32, #tpu.memory_space<vmem>>, vector<1x16x256xf32>
    %1 = vector.shape_cast %0 : vector<1x16x256xf32> to vector<16x256xf32>
    %2 = vector.extract_strided_slice %1 {offsets = [0, 0], sizes = [16, 128], strides = [1, 1]} : vector<16x256xf32> to vector<16x128xf32>
    %3 = vector.extract_strided_slice %1 {offsets = [0, 128], sizes = [16, 128], strides = [1, 1]} : vector<16x256xf32> to vector<16x128xf32>
    %4 = arith.maximumf %2, %3 : vector<16x128xf32>
    %5 = vector.extract_strided_slice %4 {offsets = [0, 0], sizes = [16, 64], strides = [1, 1]} : vector<16x128xf32> to vector<16x64xf32>
    %6 = vector.extract_strided_slice %4 {offsets = [0, 64], sizes = [16, 64], strides = [1, 1]} : vector<16x128xf32> to vector<16x64xf32>
    %7 = arith.maximumf %5, %6 : vector<16x64xf32>
    %cst = arith.constant 0.000000e+00 : f32
    %8 = vector.broadcast %cst : f32 to vector<1x64xf32>
    %c0_2 = arith.constant 0 : index
    %c0_3 = arith.constant 0 : index
    %9 = vector.load %arg9[%c0_2, %c0_3] : memref<18x64xf32, #tpu.memory_space<vmem>>, vector<1x64xf32>
    tpu.vector_store %arg9[%c0_2, %c0_3], %8 {strides = array<i32>} : memref<18x64xf32, #tpu.memory_space<vmem>>, vector<1x64xf32>,
    %cst_4 = arith.constant 0.000000e+00 : f32
    %10 = vector.broadcast %cst_4 : f32 to vector<1x64xf32>
    %c17 = arith.constant 17 : index
    %c0_5 = arith.constant 0 : index
    %11 = vector.load %arg9[%c17, %c0_5] : memref<18x64xf32, #tpu.memory_space<vmem>>, vector<1x64xf32>
    tpu.vector_store %arg9[%c17, %c0_5], %10 {strides = array<i32>} : memref<18x64xf32, #tpu.memory_space<vmem>>, vector<1x64xf32>,
    %c1 = arith.constant 1 : index
    %c0_6 = arith.constant 0 : index
    %12 = vector.load %arg9[%c1, %c0_6] : memref<18x64xf32, #tpu.memory_space<vmem>>, vector<16x64xf32>
    tpu.vector_store %arg9[%c1, %c0_6], %7 {strides = array<i32>} : memref<18x64xf32, #tpu.memory_space<vmem>>, vector<16x64xf32>,
    %c0_7 = arith.constant 0 : index
    %c0_8 = arith.constant 0 : index
    %13 = vector.load %arg9[%c0_7, %c0_8] : memref<18x64xf32, #tpu.memory_space<vmem>>, vector<16x64xf32>
    %c0_9 = arith.constant 0 : index
    %c0_10 = arith.constant 0 : index
    %c0_11 = arith.constant 0 : index
    %14 = vector.load %arg2[%c0_9, %c0_10, %c0_11] : memref<3x64x128xf32, #tpu.memory_space<vmem>>, vector<1x64x128xf32>
    %15 = vector.shape_cast %14 : vector<1x64x128xf32> to vector<64x128xf32>
    %cst_12 = arith.constant dense<0.000000e+00> : vector<16x128xf32>
    %16 = tpu.matmul %13, %15, %cst_12 {dimension_numbers = #tpu.dot_dimension_numbers<[1], [0], [0], [1], [0, 0, 1, 1], [], []>} : vector<16x64xf32>, vector<64x128xf32>, vector<16x128xf32> -> vector<16x128xf32>
    %c1_13 = arith.constant 1 : index
    %c0_14 = arith.constant 0 : index
    %17 = vector.load %arg9[%c1_13, %c0_14] : memref<18x64xf32, #tpu.memory_space<vmem>>, vector<16x64xf32>
    %c1_15 = arith.constant 1 : index
    %c0_16 = arith.constant 0 : index
    %c0_17 = arith.constant 0 : index
    %18 = vector.load %arg2[%c1_15, %c0_16, %c0_17] : memref<3x64x128xf32, #tpu.memory_space<vmem>>, vector<1x64x128xf32>
    %19 = vector.shape_cast %18 : vector<1x64x128xf32> to vector<64x128xf32>
    %cst_18 = arith.constant dense<0.000000e+00> : vector<16x128xf32>
    %20 = tpu.matmul %17, %19, %cst_18 {dimension_numbers = #tpu.dot_dimension_numbers<[1], [0], [0], [1], [0, 0, 1, 1], [], []>} : vector<16x64xf32>, vector<64x128xf32>, vector<16x128xf32> -> vector<16x128xf32>
    %21 = arith.addf %16, %20 : vector<16x128xf32>
    %c2 = arith.constant 2 : index
    %c0_19 = arith.constant 0 : index
    %22 = vector.load %arg9[%c2, %c0_19] : memref<18x64xf32, #tpu.memory_space<vmem>>, vector<16x64xf32>
    %c2_20 = arith.constant 2 : index
    %c0_21 = arith.constant 0 : index
    %c0_22 = arith.constant 0 : index
    %23 = vector.load %arg2[%c2_20, %c0_21, %c0_22] : memref<3x64x128xf32, #tpu.memory_space<vmem>>, vector<1x64x128xf32>
    %24 = vector.shape_cast %23 : vector<1x64x128xf32> to vector<64x128xf32>
    %cst_23 = arith.constant dense<0.000000e+00> : vector<16x128xf32>
    %25 = tpu.matmul %22, %24, %cst_23 {dimension_numbers = #tpu.dot_dimension_numbers<[1], [0], [0], [1], [0, 0, 1, 1], [], []>} : vector<16x64xf32>, vector<64x128xf32>, vector<16x128xf32> -> vector<16x128xf32>
    %26 = arith.addf %21, %25 : vector<16x128xf32>
    %c0_24 = arith.constant 0 : index
    %c0_25 = arith.constant 0 : index
    %27 = vector.load %arg3[%c0_24, %c0_25] : memref<1x128xf32, #tpu.memory_space<vmem>>, vector<1x128xf32>
    %28 = vector.broadcast %27 : vector<1x128xf32> to vector<16x128xf32>
    %29 = arith.mulf %26, %28 : vector<16x128xf32>
    %c0_26 = arith.constant 0 : index
    %c0_27 = arith.constant 0 : index
    %30 = vector.load %arg4[%c0_26, %c0_27] : memref<1x128xf32, #tpu.memory_space<vmem>>, vector<1x128xf32>
    %31 = vector.broadcast %30 : vector<1x128xf32> to vector<16x128xf32>
    %32 = arith.addf %29, %31 : vector<16x128xf32>
    %cst_28 = arith.constant 0.000000e+00 : f32
    %33 = vector.broadcast %cst_28 : f32 to vector<16x128xf32>
    %34 = arith.maximumf %32, %33 : vector<16x128xf32>
    %cst_29 = arith.constant 0.000000e+00 : f32
    %35 = vector.broadcast %cst_29 : f32 to vector<1x128xf32>
    %c0_30 = arith.constant 0 : index
    %c0_31 = arith.constant 0 : index
    %36 = vector.load %arg10[%c0_30, %c0_31] : memref<18x128xf32, #tpu.memory_space<vmem>>, vector<1x128xf32>
    tpu.vector_store %arg10[%c0_30, %c0_31], %35 {strides = array<i32>} : memref<18x128xf32, #tpu.memory_space<vmem>>, vector<1x128xf32>,
    %cst_32 = arith.constant 0.000000e+00 : f32
    %37 = vector.broadcast %cst_32 : f32 to vector<1x128xf32>
    %c17_33 = arith.constant 17 : index
    %c0_34 = arith.constant 0 : index
    %38 = vector.load %arg10[%c17_33, %c0_34] : memref<18x128xf32, #tpu.memory_space<vmem>>, vector<1x128xf32>
    tpu.vector_store %arg10[%c17_33, %c0_34], %37 {strides = array<i32>} : memref<18x128xf32, #tpu.memory_space<vmem>>, vector<1x128xf32>,
    %c1_35 = arith.constant 1 : index
    %c0_36 = arith.constant 0 : index
    %39 = vector.load %arg10[%c1_35, %c0_36] : memref<18x128xf32, #tpu.memory_space<vmem>>, vector<16x128xf32>
    tpu.vector_store %arg10[%c1_35, %c0_36], %34 {strides = array<i32>} : memref<18x128xf32, #tpu.memory_space<vmem>>, vector<16x128xf32>,
    %c0_37 = arith.constant 0 : index
    %c0_38 = arith.constant 0 : index
    %40 = vector.load %arg10[%c0_37, %c0_38] : memref<18x128xf32, #tpu.memory_space<vmem>>, vector<16x128xf32>
    %c0_39 = arith.constant 0 : index
    %c0_40 = arith.constant 0 : index
    %c0_41 = arith.constant 0 : index
    %41 = vector.load %arg5[%c0_39, %c0_40, %c0_41] : memref<3x128x128xf32, #tpu.memory_space<vmem>>, vector<1x128x128xf32>
    %42 = vector.shape_cast %41 : vector<1x128x128xf32> to vector<128x128xf32>
    %cst_42 = arith.constant dense<0.000000e+00> : vector<16x128xf32>
    %43 = tpu.matmul %40, %42, %cst_42 {dimension_numbers = #tpu.dot_dimension_numbers<[1], [0], [0], [1], [0, 0, 1, 1], [], []>} : vector<16x128xf32>, vector<128x128xf32>, vector<16x128xf32> -> vector<16x128xf32>
    %c1_43 = arith.constant 1 : index
    %c0_44 = arith.constant 0 : index
    %44 = vector.load %arg10[%c1_43, %c0_44] : memref<18x128xf32, #tpu.memory_space<vmem>>, vector<16x128xf32>
    %c1_45 = arith.constant 1 : index
    %c0_46 = arith.constant 0 : index
    %c0_47 = arith.constant 0 : index
    %45 = vector.load %arg5[%c1_45, %c0_46, %c0_47] : memref<3x128x128xf32, #tpu.memory_space<vmem>>, vector<1x128x128xf32>
    %46 = vector.shape_cast %45 : vector<1x128x128xf32> to vector<128x128xf32>
    %cst_48 = arith.constant dense<0.000000e+00> : vector<16x128xf32>
    %47 = tpu.matmul %44, %46, %cst_48 {dimension_numbers = #tpu.dot_dimension_numbers<[1], [0], [0], [1], [0, 0, 1, 1], [], []>} : vector<16x128xf32>, vector<128x128xf32>, vector<16x128xf32> -> vector<16x128xf32>
    %48 = arith.addf %43, %47 : vector<16x128xf32>
    %c2_49 = arith.constant 2 : index
    %c0_50 = arith.constant 0 : index
    %49 = vector.load %arg10[%c2_49, %c0_50] : memref<18x128xf32, #tpu.memory_space<vmem>>, vector<16x128xf32>
    %c2_51 = arith.constant 2 : index
    %c0_52 = arith.constant 0 : index
    %c0_53 = arith.constant 0 : index
    %50 = vector.load %arg5[%c2_51, %c0_52, %c0_53] : memref<3x128x128xf32, #tpu.memory_space<vmem>>, vector<1x128x128xf32>
    %51 = vector.shape_cast %50 : vector<1x128x128xf32> to vector<128x128xf32>
    %cst_54 = arith.constant dense<0.000000e+00> : vector<16x128xf32>
    %52 = tpu.matmul %49, %51, %cst_54 {dimension_numbers = #tpu.dot_dimension_numbers<[1], [0], [0], [1], [0, 0, 1, 1], [], []>} : vector<16x128xf32>, vector<128x128xf32>, vector<16x128xf32> -> vector<16x128xf32>
    %53 = arith.addf %48, %52 : vector<16x128xf32>
    %c0_55 = arith.constant 0 : index
    %c0_56 = arith.constant 0 : index
    %54 = vector.load %arg6[%c0_55, %c0_56] : memref<1x128xf32, #tpu.memory_space<vmem>>, vector<1x128xf32>
    %55 = vector.broadcast %54 : vector<1x128xf32> to vector<16x128xf32>
    %56 = arith.mulf %53, %55 : vector<16x128xf32>
    %c0_57 = arith.constant 0 : index
    %c0_58 = arith.constant 0 : index
    %57 = vector.load %arg7[%c0_57, %c0_58] : memref<1x128xf32, #tpu.memory_space<vmem>>, vector<1x128xf32>
    %58 = vector.broadcast %57 : vector<1x128xf32> to vector<16x128xf32>
    %59 = arith.addf %56, %58 : vector<16x128xf32>
    %cst_59 = arith.constant 0.000000e+00 : f32
    %60 = vector.broadcast %cst_59 : f32 to vector<16x128xf32>
    %61 = arith.maximumf %59, %60 : vector<16x128xf32>
    %c0_60 = arith.constant 0 : index
    %c0_61 = arith.constant 0 : index
    %c0_62 = arith.constant 0 : index
    %62 = vector.load %arg8[%c0_60, %c0_61, %c0_62] : memref<1x16x128xf32, #tpu.memory_space<vmem>>, vector<1x16x128xf32>
    %63 = vector.shape_cast %62 : vector<1x16x128xf32> to vector<16x128xf32>
    %64 = vector.shape_cast %61 : vector<16x128xf32> to vector<1x16x128xf32>
    tpu.vector_store %arg8[%c0_60, %c0_61, %c0_62], %64 {strides = array<i32>} : memref<1x16x128xf32, #tpu.memory_space<vmem>>, vector<1x16x128xf32>,
    return
  }
  func.func @transform_0(%arg0: i32) -> (i32, i32, i32) {
    %c0_i32 = arith.constant 0 : i32
    %c0_i32_0 = arith.constant 0 : i32
    %c0_i32_1 = arith.constant 0 : i32
    return %arg0, %c0_i32, %c0_i32_0 : i32, i32, i32
  }
  func.func @transform_1(%arg0: i32) -> (i32, i32, i32) {
    %c0_i32 = arith.constant 0 : i32
    %c0_i32_0 = arith.constant 0 : i32
    %c0_i32_1 = arith.constant 0 : i32
    %c0_i32_2 = arith.constant 0 : i32
    return %c0_i32, %c0_i32_0, %c0_i32_1 : i32, i32, i32
  }
  func.func @transform_2(%arg0: i32) -> (i32, i32) {
    %c0_i32 = arith.constant 0 : i32
    %c0_i32_0 = arith.constant 0 : i32
    %c0_i32_1 = arith.constant 0 : i32
    return %c0_i32, %c0_i32_0 : i32, i32
  }
  func.func @transform_3(%arg0: i32) -> (i32, i32) {
    %c0_i32 = arith.constant 0 : i32
    %c0_i32_0 = arith.constant 0 : i32
    %c0_i32_1 = arith.constant 0 : i32
    return %c0_i32, %c0_i32_0 : i32, i32
  }
  func.func @transform_4(%arg0: i32) -> (i32, i32, i32) {
    %c0_i32 = arith.constant 0 : i32
    %c0_i32_0 = arith.constant 0 : i32
    %c0_i32_1 = arith.constant 0 : i32
    %c0_i32_2 = arith.constant 0 : i32
    return %c0_i32, %c0_i32_0, %c0_i32_1 : i32, i32, i32
  }
  func.func @transform_5(%arg0: i32) -> (i32, i32) {
    %c0_i32 = arith.constant 0 : i32
    %c0_i32_0 = arith.constant 0 : i32
    %c0_i32_1 = arith.constant 0 : i32
    return %c0_i32, %c0_i32_0 : i32, i32
  }
  func.func @transform_6(%arg0: i32) -> (i32, i32) {
    %c0_i32 = arith.constant 0 : i32
    %c0_i32_0 = arith.constant 0 : i32
    %c0_i32_1 = arith.constant 0 : i32
    return %c0_i32, %c0_i32_0 : i32, i32
  }
  func.func @transform_7(%arg0: i32) -> (i32, i32, i32) {
    %c0_i32 = arith.constant 0 : i32
    %c0_i32_0 = arith.constant 0 : i32
    %c0_i32_1 = arith.constant 0 : i32
    return %arg0, %c0_i32, %c0_i32_0 : i32, i32, i32
  }
}

</mosaic_0001>

<llo_original>
// kernel: tile.23
$region0: #{tile.23}
  #allocation0 [shape = 's32[1]{0}', space=sflag, size = 0x4, scoped, tag = 'scoped memory for tile.23']
  %s0 = inlined_call_operand.vmem [shape: f32[8], index: 0, kind: input, shape index: {}]
  %s1 = inlined_call_operand.vmem [shape: f32[16,8], index: 1, kind: output, shape index: {}]
  // Predicated region
  $region2: #{tile.23} parent=0 // pred_check
    _
  $region3: #{tile.23} parent=0 // pred_check_branch
    %3 = sbr.rel (0) target = $region5
  $region4: #{tile.23} parent=0 // pred_region
    _
  $region5: #{tile.23} parent=0 // pred_fallthru
    _
  %v4 = vld [vmem:[%s0] ss:$0 sm:$0xff]
  %5 = vst [vmem:[%s1] sm:$0xff] %v4
  %s6 = scalar_lea.vmem %s1, 8
  %7 = vst [vmem:[%s6] sm:$0xff] %v4

// kernel: tile.24
$region0: #{tile.24}
  %s0 = inlined_call_operand.vmem [shape: f32[16,8], index: 0, kind: input, shape index: {}]
  %s1 = inlined_call_operand.vmem [shape: f32[1,128], index: 1, kind: output, shape index: {}]
  $region1: #{tile.24} parent=0
    #allocation0 [shape = 'u8[4096]{0}', space=vmem, size = 0x1000, scoped, tag = 'scoped mem for output reshape']
    %v2 = vld [vmem:[%s0] sm:$0x1]
    %vm3 = vcmask 64512
    %4 = vst.msk [vmem:[#allocation0] sm:$0x1] %vm3, %v2
    %s5 = scalar_lea.vmem %s0, 15
    %v6 = vld [vmem:[%s5] sm:$0x1]
    %7 = vrot.lane.b32.xlu0 %v6, 120
    %v8 = vpop.permute.xlu0 %7
    %vm9 = vcmask 1048512
    %10 = vst.msk [vmem:[#allocation0] sm:$0x1] %vm9, %v8
    %s11 = scalar_lea.vmem %s0, 14
    %v12 = vld [vmem:[%s11] sm:$0x1]
    %13 = vrot.lane.b32.xlu0 %v12, 112
    %v14 = vpop.permute.xlu0 %13
    %vm15 = vcmask 982912
    %16 = vst.msk [vmem:[#allocation0] sm:$0x1] %vm15, %v14
    %s17 = scalar_lea.vmem %s0, 13
    %v18 = vld [vmem:[%s17] sm:$0x1]
    %19 = vrot.lane.b32.xlu0 %v18, 104
    %v20 = vpop.permute.xlu0 %19
    %vm21 = vcmask 917312
    %22 = vst.msk [vmem:[#allocation0] sm:$0x1] %vm21, %v20
    %s23 = scalar_lea.vmem %s0, 12
    %v24 = vld [vmem:[%s23] sm:$0x1]
    %25 = vrot.lane.b32.xlu0 %v24, 96
    %v26 = vpop.permute.xlu0 %25
    %vm27 = vcmask 851712
    %28 = vst.msk [vmem:[#allocation0] sm:$0x1] %vm27, %v26
    %s29 = scalar_lea.vmem %s0, 11
    %v30 = vld [vmem:[%s29] sm:$0x1]
    %31 = vrot.lane.b32.xlu0 %v30, 88
    %v32 = vpop.permute.xlu0 %31
    %vm33 = vcmask 786112
    %34 = vst.msk [vmem:[#allocation0] sm:$0x1] %vm33, %v32
    %s35 = scalar_lea.vmem %s0, 10
    %v36 = vld [vmem:[%s35] sm:$0x1]
    %37 = vrot.lane.b32.xlu0 %v36, 80
    %v38 = vpop.permute.xlu0 %37
    %vm39 = vcmask 720512
    %40 = vst.msk [vmem:[#allocation0] sm:$0x1] %vm39, %v38
    %s41 = scalar_lea.vmem %s0, 9
    %v42 = vld [vmem:[%s41] sm:$0x1]
    %43 = vrot.lane.b32.xlu0 %v42, 72
    %v44 = vpop.permute.xlu0 %43
    %vm45 = vcmask 654912
    %46 = vst.msk [vmem:[#allocation0] sm:$0x1] %vm45, %v44
    %s47 = scalar_lea.vmem %s0, 8
    %v48 = vld [vmem:[%s47] sm:$0x1]
    %49 = vrot.lane.b32.xlu0 %v48, 64
    %v50 = vpop.permute.xlu0 %49
    %vm51 = vcmask 589312
    %52 = vst.msk [vmem:[#allocation0] sm:$0x1] %vm51, %v50
    %s53 = scalar_lea.vmem %s0, 7
    %v54 = vld [vmem:[%s53] sm:$0x1]
    %55 = vrot.lane.b32.xlu0 %v54, 56
    %v56 = vpop.permute.xlu0 %55
    %vm57 = vcmask 523712
    %58 = vst.msk [vmem:[#allocation0] sm:$0x1] %vm57, %v56
    %s59 = scalar_lea.vmem %s0, 6
    %v60 = vld [vmem:[%s59] sm:$0x1]
    %61 = vrot.lane.b32.xlu0 %v60, 48
    %v62 = vpop.permute.xlu0 %61
    %vm63 = vcmask 458112
    %64 = vst.msk [vmem:[#allocation0] sm:$0x1] %vm63, %v62
    %s65 = scalar_lea.vmem %s0, 5
    %v66 = vld [vmem:[%s65] sm:$0x1]
    %67 = vrot.lane.b32.xlu0 %v66, 40
    %v68 = vpop.permute.xlu0 %67
    %vm69 = vcmask 392512
    %70 = vst.msk [vmem:[#allocation0] sm:$0x1] %vm69, %v68
    %s71 = scalar_lea.vmem %s0, 4
    %v72 = vld [vmem:[%s71] sm:$0x1]
    %73 = vrot.lane.b32.xlu0 %v72, 32
    %v74 = vpop.permute.xlu0 %73
    %vm75 = vcmask 326912
    %76 = vst.msk [vmem:[#allocation0] sm:$0x1] %vm75, %v74
    %s77 = scalar_lea.vmem %s0, 3
    %v78 = vld [vmem:[%s77] sm:$0x1]
    %79 = vrot.lane.b32.xlu0 %v78, 24
    %v80 = vpop.permute.xlu0 %79
    %vm81 = vcmask 261312
    %82 = vst.msk [vmem:[#allocation0] sm:$0x1] %vm81, %v80
    %s83 = scalar_lea.vmem %s0, 2
    %v84 = vld [vmem:[%s83] sm:$0x1]
    %85 = vrot.lane.b32.xlu0 %v84, 16
    %v86 = vpop.permute.xlu0 %85
    %vm87 = vcmask 195712
    %88 = vst.msk [vmem:[#allocation0] sm:$0x1] %vm87, %v86
    %s89 = scalar_lea.vmem %s0, 1
    %v90 = vld [vmem:[%s89] sm:$0x1]
    %91 = vrot.lane.b32.xlu0 %v90, 8
    %v92 = vpop.permute.xlu0 %91
    %vm93 = vcmask 130112
    %94 = vst.msk [vmem:[#allocation0] sm:$0x1] %vm93, %v92
    %s96 = ssub.s32 2, 1
    %v97 = vld [vmem:[#allocation0] sm:%s96]
    %s99 = ssub.s32 2, 1
    %100 = vst [vmem:[%s1] sm:%s99] %v97

// kernel: down_block_forward.1
$region0: #{down_block_forward.1}
  #allocation0 [shape = 'u32[]', space=smem, size = 0x4, offset = 0x4, fixed_abs, tag = 'smem constant byte address 0x4 - core index']
  #allocation1 [shape = 'u32[72,128]{1,0:T(1,128)}', space=vmem, size = 0x9000, scoped, tag = 'internal scratch']
  #allocation2 [shape = 'f32[18,64]{1,0:T(8,128)}', space=vmem, size = 0x3000, scoped, tag = 'scratch operand']
  #allocation3 [shape = 'f32[18,128]{1,0:T(8,128)}', space=vmem, size = 0x3000, scoped, tag = 'scratch operand']
  %s0 = inlined_call_operand.vmem [shape: f32[2,16,256], index: 0, kind: input, shape index: {}]
  %s1 = inlined_call_operand.vmem [shape: f32[3,64,128], index: 1, kind: input, shape index: {}]
  %s2 = inlined_call_operand.vmem [shape: f32[1,128], index: 2, kind: input, shape index: {}]
  %s3 = inlined_call_operand.vmem [shape: f32[1,128], index: 3, kind: input, shape index: {}]
  %s4 = inlined_call_operand.vmem [shape: f32[3,128,128], index: 4, kind: input, shape index: {}]
  %s5 = inlined_call_operand.vmem [shape: f32[1,128], index: 5, kind: input, shape index: {}]
  %s6 = inlined_call_operand.vmem [shape: f32[1,128], index: 6, kind: input, shape index: {}]
  %s7 = inlined_call_operand.vmem [shape: f32[2,16,128], index: 7, kind: output, shape index: {}]
  %s8 = sld [smem:[#allocation0]]
  $region61: #{down_block_forward.1} parent=0
    _
  %s10 = ssub.s32 1, %s8
  %s11 = scalar_select 0, %s10, %s8
  loop: start=0, step=1, limit=4
  $region2: #{down_block_forward.1} parent=0 // loop_pre_header
    _
  $region3: #{down_block_forward.1} parent=0 // loop_header
    %s13 = sphi 0, %s17
    %p14 = scmp.ge.s32.totalorder %s13, 4
    %s23 = sphi 0, %s25
    %s26 = sphi 0, %s23
    %s27 = sphi 0, %s26
    %s43 = sphi 0, %s27
    %s47 = sphi 0, %s47
    %s49 = sphi 0, %s47
    %s50 = sphi 0, %s49
    %s64 = sphi 0, %s50
    %s68 = sphi 0, %s68
    %s70 = sphi 0, %s68
    %s71 = sphi 0, %s70
    %s85 = sphi 0, %s71
    %s89 = sphi 0, %s89
    %s91 = sphi 0, %s89
    %s92 = sphi 0, %s91
    %s106 = sphi 0, %s92
    %s110 = sphi 0, %s110
    %s112 = sphi 0, %s110
    %s113 = sphi 0, %s112
    %s127 = sphi 0, %s113
    %s131 = sphi 0, %s131
    %s133 = sphi 0, %s131
    %s134 = sphi 0, %s133
    %s148 = sphi 0, %s134
    %s152 = sphi 0, %s152
    %s154 = sphi 0, %s152
    %s155 = sphi 0, %s154
    %s169 = sphi 0, %s155
    %s175 = sphi 0, %s177
    %s178 = sphi 0, %s175
    %s179 = sphi 0, %s178
    %s195 = sphi 0, %s179
  $region4: #{down_block_forward.1} parent=0 // loop_header_branch
    %16 = sbr.rel (%p14) target = $region8
  $region5: #{down_block_forward.1} parent=0 // loop_body
    %s18 = ssub.s32 %s13, 1
    %s19 = ssub.s32 %s13, 2
    %s20 = sadd.s32 %s13, 1
    %s21 = ssub.s32 %s13, %s20
    %p22 = scmp.eq.s32.totalorder %s21, 0
    %s24 = sadd.s32 %s23, 1
    %s25 = scalar_select %p22, %s23, %s24
    %p28 = pneg %p22
    %p29 = scmp.eq.s32.totalorder %s13, 1
    %p30 = por %p28, %p29
    %p31 = scmp.ne.s32.totalorder %s23, %s26
    %p32 = scmp.eq.s32.totalorder %s13, 0
    %p33 = por %p31, %p32
    %p34 = scmp.ne.s32.totalorder %s23, %s26
    %p35 = scmp.eq.s32.totalorder %s18, 1
    %p36 = por %p34, %p35
    %p37 = scmp.ne.s32.totalorder %s26, %s27
    %p38 = scmp.eq.s32.totalorder %s18, 0
    %p39 = por %p37, %p38
    %p40 = scmp.ne.s32.totalorder %s26, %s27
    %p41 = scmp.eq.s32.totalorder %s19, 1
    %p42 = por %p40, %p41
    %p44 = scmp.ne.s32.totalorder %s27, %s43
    %p45 = scmp.eq.s32.totalorder %s19, 0
    %p46 = por %p44, %p45
    %s48 = sadd.s32 %s47, 1
    %p51 = scmp.eq.s32.totalorder %s13, 1
    %p52 = scmp.ne.s32.totalorder %s47, %s49
    %p53 = scmp.eq.s32.totalorder %s13, 0
    %p54 = por %p52, %p53
    %p55 = scmp.ne.s32.totalorder %s47, %s49
    %p56 = scmp.eq.s32.totalorder %s18, 1
    %p57 = por %p55, %p56
    %p58 = scmp.ne.s32.totalorder %s49, %s50
    %p59 = scmp.eq.s32.totalorder %s18, 0
    %p60 = por %p58, %p59
    %p61 = scmp.ne.s32.totalorder %s49, %s50
    %p62 = scmp.eq.s32.totalorder %s19, 1
    %p63 = por %p61, %p62
    %p65 = scmp.ne.s32.totalorder %s50, %s64
    %p66 = scmp.eq.s32.totalorder %s19, 0
    %p67 = por %p65, %p66
    %s69 = sadd.s32 %s68, 1
    %p72 = scmp.eq.s32.totalorder %s13, 1
    %p73 = scmp.ne.s32.totalorder %s68, %s70
    %p74 = scmp.eq.s32.totalorder %s13, 0
    %p75 = por %p73, %p74
    %p76 = scmp.ne.s32.totalorder %s68, %s70
    %p77 = scmp.eq.s32.totalorder %s18, 1
    %p78 = por %p76, %p77
    %p79 = scmp.ne.s32.totalorder %s70, %s71
    %p80 = scmp.eq.s32.totalorder %s18, 0
    %p81 = por %p79, %p80
    %p82 = scmp.ne.s32.totalorder %s70, %s71
    %p83 = scmp.eq.s32.totalorder %s19, 1
    %p84 = por %p82, %p83
    %p86 = scmp.ne.s32.totalorder %s71, %s85
    %p87 = scmp.eq.s32.totalorder %s19, 0
    %p88 = por %p86, %p87
    %s90 = sadd.s32 %s89, 1
    %p93 = scmp.eq.s32.totalorder %s13, 1
    %p94 = scmp.ne.s32.totalorder %s89, %s91
    %p95 = scmp.eq.s32.totalorder %s13, 0
    %p96 = por %p94, %p95
    %p97 = scmp.ne.s32.totalorder %s89, %s91
    %p98 = scmp.eq.s32.totalorder %s18, 1
    %p99 = por %p97, %p98
    %p100 = scmp.ne.s32.totalorder %s91, %s92
    %p101 = scmp.eq.s32.totalorder %s18, 0
    %p102 = por %p100, %p101
    %p103 = scmp.ne.s32.totalorder %s91, %s92
    %p104 = scmp.eq.s32.totalorder %s19, 1
    %p105 = por %p103, %p104
    %p107 = scmp.ne.s32.totalorder %s92, %s106
    %p108 = scmp.eq.s32.totalorder %s19, 0
    %p109 = por %p107, %p108
    %s111 = sadd.s32 %s110, 1
    %p114 = scmp.eq.s32.totalorder %s13, 1
    %p115 = scmp.ne.s32.totalorder %s110, %s112
    %p116 = scmp.eq.s32.totalorder %s13, 0
    %p117 = por %p115, %p116
    %p118 = scmp.ne.s32.totalorder %s110, %s112
    %p119 = scmp.eq.s32.totalorder %s18, 1
    %p120 = por %p118, %p119
    %p121 = scmp.ne.s32.totalorder %s112, %s113
    %p122 = scmp.eq.s32.totalorder %s18, 0
    %p123 = por %p121, %p122
    %p124 = scmp.ne.s32.totalorder %s112, %s113
    %p125 = scmp.eq.s32.totalorder %s19, 1
    %p126 = por %p124, %p125
    %p128 = scmp.ne.s32.totalorder %s113, %s127
    %p129 = scmp.eq.s32.totalorder %s19, 0
    %p130 = por %p128, %p129
    %s132 = sadd.s32 %s131, 1
    %p135 = scmp.eq.s32.totalorder %s13, 1
    %p136 = scmp.ne.s32.totalorder %s131, %s133
    %p137 = scmp.eq.s32.totalorder %s13, 0
    %p138 = por %p136, %p137
    %p139 = scmp.ne.s32.totalorder %s131, %s133
    %p140 = scmp.eq.s32.totalorder %s18, 1
    %p141 = por %p139, %p140
    %p142 = scmp.ne.s32.totalorder %s133, %s134
    %p143 = scmp.eq.s32.totalorder %s18, 0
    %p144 = por %p142, %p143
    %p145 = scmp.ne.s32.totalorder %s133, %s134
    %p146 = scmp.eq.s32.totalorder %s19, 1
    %p147 = por %p145, %p146
    %p149 = scmp.ne.s32.totalorder %s134, %s148
    %p150 = scmp.eq.s32.totalorder %s19, 0
    %p151 = por %p149, %p150
    %s153 = sadd.s32 %s152, 1
    %p156 = scmp.eq.s32.totalorder %s13, 1
    %p157 = scmp.ne.s32.totalorder %s152, %s154
    %p158 = scmp.eq.s32.totalorder %s13, 0
    %p159 = por %p157, %p158
    %p160 = scmp.ne.s32.totalorder %s152, %s154
    %p161 = scmp.eq.s32.totalorder %s18, 1
    %p162 = por %p160, %p161
    %p163 = scmp.ne.s32.totalorder %s154, %s155
    %p164 = scmp.eq.s32.totalorder %s18, 0
    %p165 = por %p163, %p164
    %p166 = scmp.ne.s32.totalorder %s154, %s155
    %p167 = scmp.eq.s32.totalorder %s19, 1
    %p168 = por %p166, %p167
    %p170 = scmp.ne.s32.totalorder %s155, %s169
    %p171 = scmp.eq.s32.totalorder %s19, 0
    %p172 = por %p170, %p171
    %s173 = ssub.s32 %s13, %s20
    %p174 = scmp.eq.s32.totalorder %s173, 0
    %s176 = sadd.s32 %s175, 1
    %s177 = scalar_select %p174, %s175, %s176
    %p180 = pneg %p174
    %p181 = scmp.eq.s32.totalorder %s13, 1
    %p182 = por %p180, %p181
    %p183 = scmp.ne.s32.totalorder %s175, %s178
    %p184 = scmp.eq.s32.totalorder %s13, 0
    %p185 = por %p183, %p184
    %p186 = scmp.ne.s32.totalorder %s175, %s178
    %p187 = scmp.eq.s32.totalorder %s18, 1
    %p188 = por %p186, %p187
    %p189 = scmp.ne.s32.totalorder %s178, %s179
    %p190 = scmp.eq.s32.totalorder %s18, 0
    %p191 = por %p189, %p190
    %p192 = scmp.ne.s32.totalorder %s178, %s179
    %p193 = scmp.eq.s32.totalorder %s19, 1
    %p194 = por %p192, %p193
    %p196 = scmp.ne.s32.totalorder %s179, %s195
    %p197 = scmp.eq.s32.totalorder %s19, 0
    %p198 = por %p196, %p197
    %p199 = scmp.le.s32.totalorder 1, %s13
    %p200 = scmp.lt.s32.totalorder %s13, 3
    %p201 = pnand %p199, %p200
    %p202 = pneg %p201
    // Predicated region
    $region9: #{down_block_forward.1} parent=5 // pred_check
      _
    $region10: #{down_block_forward.1} parent=5 // pred_check_branch
      %204 = sbr.rel (%p201) target = $region12
    $region11: #{down_block_forward.1} parent=5 // pred_region
      %s205 = ssub.s32 %s13, 1
      // Predicated region
      $region13: #{down_block_forward.1} parent=11 // pred_check
        %p206 = pneg %p60
      $region14: #{down_block_forward.1} parent=11 // pred_check_branch
        %208 = sbr.rel (%p206) target = $region16
      $region15: #{down_block_forward.1} parent=11 // pred_region
        _
      $region16: #{down_block_forward.1} parent=11 // pred_fallthru
        _
      // Predicated region
      $region17: #{down_block_forward.1} parent=11 // pred_check
        %p209 = pneg %p81
      $region18: #{down_block_forward.1} parent=11 // pred_check_branch
        %211 = sbr.rel (%p209) target = $region20
      $region19: #{down_block_forward.1} parent=11 // pred_region
        _
      $region20: #{down_block_forward.1} parent=11 // pred_fallthru
        _
      // Predicated region
      $region21: #{down_block_forward.1} parent=11 // pred_check
        %p212 = pneg %p102
      $region22: #{down_block_forward.1} parent=11 // pred_check_branch
        %214 = sbr.rel (%p212) target = $region24
      $region23: #{down_block_forward.1} parent=11 // pred_region
        _
      $region24: #{down_block_forward.1} parent=11 // pred_fallthru
        _
      // Predicated region
      $region25: #{down_block_forward.1} parent=11 // pred_check
        %p215 = pneg %p123
      $region26: #{down_block_forward.1} parent=11 // pred_check_branch
        %217 = sbr.rel (%p215) target = $region28
      $region27: #{down_block_forward.1} parent=11 // pred_region
        _
      $region28: #{down_block_forward.1} parent=11 // pred_fallthru
        _
      // Predicated region
      $region29: #{down_block_forward.1} parent=11 // pred_check
        %p218 = pneg %p144
      $region30: #{down_block_forward.1} parent=11 // pred_check_branch
        %220 = sbr.rel (%p218) target = $region32
      $region31: #{down_block_forward.1} parent=11 // pred_region
        _
      $region32: #{down_block_forward.1} parent=11 // pred_fallthru
        _
      // Predicated region
      $region33: #{down_block_forward.1} parent=11 // pred_check
        %p221 = pneg %p165
      $region34: #{down_block_forward.1} parent=11 // pred_check_branch
        %223 = sbr.rel (%p221) target = $region36
      $region35: #{down_block_forward.1} parent=11 // pred_region
        _
      $region36: #{down_block_forward.1} parent=11 // pred_fallthru
        _
    $region12: #{down_block_forward.1} parent=5 // pred_fallthru
      _
    %p224 = scmp.lt.s32.totalorder %s13, 2
    // Predicated region
    $region37: #{down_block_forward.1} parent=5 // pred_check
      %p225 = pneg %p224
    $region38: #{down_block_forward.1} parent=5 // pred_check_branch
      %227 = sbr.rel (%p225) target = $region40
    $region39: #{down_block_forward.1} parent=5 // pred_region
      // Predicated region
      $region41: #{down_block_forward.1} parent=39 // pred_check
        %p228 = pneg %p33
      $region42: #{down_block_forward.1} parent=39 // pred_check_branch
        %230 = sbr.rel (%p228) target = $region44
      $region43: #{down_block_forward.1} parent=39 // pred_region
        %p231 = scmp.lt.s32.totalorder %s13, 1
        %s232 = scalar_select %p231, %s13, 1
        %s233 = smul.addr %s232, 4
        %s234 = smul.addr %s233, 8
        %s235 = scalar_lea.vmem %s0, %s234
      $region44: #{down_block_forward.1} parent=39 // pred_fallthru
        _
    $region40: #{down_block_forward.1} parent=5 // pred_fallthru
      _
    %p236 = scmp.le.s32.totalorder 1, %s13
    %p237 = scmp.lt.s32.totalorder %s13, 3
    %p238 = pnand %p236, %p237
    %p239 = pneg %p238
    // Predicated region
    $region45: #{down_block_forward.1} parent=5 // pred_check
      _
    $region46: #{down_block_forward.1} parent=5 // pred_check_branch
      %241 = sbr.rel (%p238) target = $region48
    $region47: #{down_block_forward.1} parent=5 // pred_region
      %s242 = ssub.s32 %s13, 1
      %p243 = scmp.lt.s32.totalorder %s18, 1
      %s244 = scalar_select %p243, %s18, 1
      %s245 = smul.addr %s244, 4
      %s246 = smul.addr %s245, 8
      %s247 = scalar_lea.vmem %s0, %s246
      %p248 = pneg %p39
      %p249 = pneg %p36
      %p250 = pneg %p60
      %p251 = pneg %p57
      %p252 = pneg %p81
      %p253 = pneg %p78
      %p254 = pneg %p102
      %p255 = pneg %p99
      %p256 = pneg %p123
      %p257 = pneg %p120
      %p258 = pneg %p144
      %p259 = pneg %p141
      %p260 = pneg %p165
      %p261 = pneg %p162
      %p262 = pneg %p191
      %p263 = pneg %p188
      %p264 = scmp.lt.s32.totalorder %s18, 1
      %s265 = scalar_select %p264, %s18, 1
      %s266 = smul.addr %s265, 2
      %s267 = smul.addr %s266, 8
      %s268 = scalar_lea.vmem %s7, %s267
      %p269 = scmp.lt.s32.totalorder %s18, 1
      %s270 = scalar_select %p269, %s18, 1
      %s271 = smul.addr %s270, 4
      %s272 = smul.addr %s271, 8
      %s273 = scalar_lea.vmem %s0, %s272
      %p274 = scmp.lt.s32.totalorder %s18, 1
      %s275 = scalar_select %p274, %s18, 1
      %s276 = smul.addr %s275, 2
      %s277 = smul.addr %s276, 8
      %s278 = scalar_lea.vmem %s7, %s277
      %v279 = vld [vmem:[%s273] sm:$0xff]
      %v280 = vld [vmem:[%s273 + $0x8] sm:$0xff]
      %v281 = vld [vmem:[%s273 + $0x10] sm:$0xff]
      %v282 = vld [vmem:[%s273 + $0x18] sm:$0xff]
      %v283 = vmax.f32 %v279, %v280
      %v284 = vmax.f32 %v281, %v282
      %287 = vrot.lane.b32.xlu0 %v283, 64
      %v288 = vpop.permute.xlu0 %287
      %289 = vrot.lane.b32.xlu0 %v284, 64
      %v290 = vpop.permute.xlu0 %289
      %v293 = vmax.f32 %v283, %v288
      %v294 = vmax.f32 %v284, %v290
      %vm295 = vcmask 516096
      %296 = vst.msk [vmem:[#allocation2] sm:$0x1] %vm295, 0.0
      %297 = vst.msk [vmem:[#allocation2 + $0x11] sm:$0x1] %vm295, 0.0
      %vm298 = vcmask 523264
      %299 = vst.msk [vmem:[#allocation2 + $0x1] sm:$0xff] %vm298, %v293
      %300 = vst.msk [vmem:[#allocation2 + $0x9] sm:$0xff] %vm298, %v294
      %v301 = vld [vmem:[#allocation2] sm:$0xff]
      %v302 = vld [vmem:[#allocation2 + $0x8] sm:$0xff]
      %v303 = vld [vmem:[%s1] sm:$0xff]
      %v304 = vld [vmem:[%s1 + $0x8] sm:$0xff]
      %v305 = vld [vmem:[%s1 + $0x10] sm:$0xff]
      %v306 = vld [vmem:[%s1 + $0x18] sm:$0xff]
      %v307 = vld [vmem:[%s1 + $0x20] sm:$0xff]
      %v308 = vld [vmem:[%s1 + $0x28] sm:$0xff]
      %v309 = vld [vmem:[%s1 + $0x30] sm:$0xff]
      %v310 = vld [vmem:[%s1 + $0x38] sm:$0xff]
      %v311 = vld [vmem:[#allocation2 + $0x1] sm:$0xff]
      %v312 = vld [vmem:[#allocation2 + $0x9] sm:$0xff]
      %s313 = scalar_lea.vmem %s1, 64
      %v314 = vld [vmem:[%s313] sm:$0xff]
      %v315 = vld [vmem:[%s313 + $0x8] sm:$0xff]
      %v316 = vld [vmem:[%s313 + $0x10] sm:$0xff]
      %v317 = vld [vmem:[%s313 + $0x18] sm:$0xff]
      %v318 = vld [vmem:[%s313 + $0x20] sm:$0xff]
      %v319 = vld [vmem:[%s313 + $0x28] sm:$0xff]
      %v320 = vld [vmem:[%s313 + $0x30] sm:$0xff]
      %v321 = vld [vmem:[%s313 + $0x38] sm:$0xff]
      %v323 = vsel %vm298, %v311, 0
      %v326 = vsel %vm298, %v312, 0
      %328 = vmatpush.msra.mxu0 0.0
      %329 = vmatpush.msra.mxu0 0.0
      %330 = vmatpush.msra.mxu0 0.0
      %331 = vmatpush.msra.mxu0 0.0
      %332 = vmatpush.msra.mxu0 0.0
      %333 = vmatpush.msra.mxu0 0.0
      %334 = vmatpush.msra.mxu0 0.0
      %335 = vmatpush.msra.mxu0 0.0
      %336 = vmatpush.msra.mxu0 %v321
      %337 = vmatpush.msra.mxu0 %v320
      %338 = vmatpush.msra.mxu0 %v319
      %339 = vmatpush.msra.mxu0 %v318
      %340 = vmatpush.msra.mxu0 %v317
      %341 = vmatpush.msra.mxu0 %v316
      %342 = vmatpush.msra.mxu0 %v315
      %343 = vmatpush.msra.mxu0 %v314
      %344 = vmatmul.f32.gmra.mxu0 %v323
      %v345 = vpop.f32.mrf.mxu0
      %v346 = vadd.f32 0.0, %v345
      %347 = vmatmul.f32.gmra.mxu0 %v326
      %v348 = vpop.f32.mrf.mxu0
      %v349 = vadd.f32 0.0, %v348
      %350 = vdwg.mxu0
      %v352 = vsel %vm298, %v301, 0
      %v355 = vsel %vm298, %v302, 0
      %357 = vmatpush.msra.mxu0 0.0
      %358 = vmatpush.msra.mxu0 0.0
      %359 = vmatpush.msra.mxu0 0.0
      %360 = vmatpush.msra.mxu0 0.0
      %361 = vmatpush.msra.mxu0 0.0
      %362 = vmatpush.msra.mxu0 0.0
      %363 = vmatpush.msra.mxu0 0.0
      %364 = vmatpush.msra.mxu0 0.0
      %365 = vmatpush.msra.mxu0 %v310
      %366 = vmatpush.msra.mxu0 %v309
      %367 = vmatpush.msra.mxu0 %v308
      %368 = vmatpush.msra.mxu0 %v307
      %369 = vmatpush.msra.mxu0 %v306
      %370 = vmatpush.msra.mxu0 %v305
      %371 = vmatpush.msra.mxu0 %v304
      %372 = vmatpush.msra.mxu0 %v303
      %373 = vmatmul.f32.gmra.mxu0 %v352
      %v374 = vpop.f32.mrf.mxu0
      %v375 = vadd.f32 %v346, %v374
      %376 = vmatmul.f32.gmra.mxu0 %v355
      %v377 = vpop.f32.mrf.mxu0
      %v378 = vadd.f32 %v349, %v377
      %379 = vdwg.mxu0
      %v380 = vld [vmem:[#allocation2 + $0x2] sm:$0xff]
      %v381 = vld [vmem:[#allocation2 + $0xa] sm:$0xff]
      %s382 = scalar_lea.vmem %s1, 128
      %v383 = vld [vmem:[%s382] sm:$0xff]
      %v384 = vld [vmem:[%s382 + $0x8] sm:$0xff]
      %v385 = vld [vmem:[%s382 + $0x10] sm:$0xff]
      %v386 = vld [vmem:[%s382 + $0x18] sm:$0xff]
      %v387 = vld [vmem:[%s382 + $0x20] sm:$0xff]
      %v388 = vld [vmem:[%s382 + $0x28] sm:$0xff]
      %v389 = vld [vmem:[%s382 + $0x30] sm:$0xff]
      %v390 = vld [vmem:[%s382 + $0x38] sm:$0xff]
      %v392 = vsel %vm298, %v380, 0
      %v395 = vsel %vm298, %v381, 0
      %397 = vmatpush.msra.mxu0 0.0
      %398 = vmatpush.msra.mxu0 0.0
      %399 = vmatpush.msra.mxu0 0.0
      %400 = vmatpush.msra.mxu0 0.0
      %401 = vmatpush.msra.mxu0 0.0
      %402 = vmatpush.msra.mxu0 0.0
      %403 = vmatpush.msra.mxu0 0.0
      %404 = vmatpush.msra.mxu0 0.0
      %405 = vmatpush.msra.mxu0 %v390
      %406 = vmatpush.msra.mxu0 %v389
      %407 = vmatpush.msra.mxu0 %v388
      %408 = vmatpush.msra.mxu0 %v387
      %409 = vmatpush.msra.mxu0 %v386
      %410 = vmatpush.msra.mxu0 %v385
      %411 = vmatpush.msra.mxu0 %v384
      %412 = vmatpush.msra.mxu0 %v383
      %413 = vmatmul.f32.gmra.mxu0 %v392
      %v414 = vpop.f32.mrf.mxu0
      %v415 = vadd.f32 0.0, %v414
      %416 = vmatmul.f32.gmra.mxu0 %v395
      %v417 = vpop.f32.mrf.mxu0
      %v418 = vadd.f32 0.0, %v417
      %419 = vdwg.mxu0
      %v420 = vadd.f32 %v375, %v415
      %v421 = vadd.f32 %v378, %v418
      %v422 = vld [vmem:[%s2] sm:$0x1]
      %v424 = vperm.slane %v422, 0
      %v426 = vmul.f32 %v420, %v424
      %v427 = vmul.f32 %v421, %v424
      %v428 = vld [vmem:[%s3] sm:$0x1]
      %v430 = vperm.slane %v428, 0
      %v432 = vadd.f32 %v426, %v430
      %v433 = vadd.f32 %v427, %v430
      %v434 = vmax.f32 %v432, 0.0
      %v435 = vmax.f32 %v433, 0.0
      %436 = vst [vmem:[#allocation3] sm:$0x1] 0.0
      %437 = vst [vmem:[#allocation3 + $0x11] sm:$0x1] 0.0
      %438 = vst [vmem:[#allocation3 + $0x1] sm:$0xff] %v434
      %439 = vst [vmem:[#allocation3 + $0x9] sm:$0xff] %v435
      %v440 = vld [vmem:[#allocation3] sm:$0xff]
      %v441 = vld [vmem:[#allocation3 + $0x8] sm:$0xff]
      %v442 = vld [vmem:[%s4] sm:$0xff]
      %v443 = vld [vmem:[%s4 + $0x8] sm:$0xff]
      %v444 = vld [vmem:[%s4 + $0x10] sm:$0xff]
      %v445 = vld [vmem:[%s4 + $0x18] sm:$0xff]
      %v446 = vld [vmem:[%s4 + $0x20] sm:$0xff]
      %v447 = vld [vmem:[%s4 + $0x28] sm:$0xff]
      %v448 = vld [vmem:[%s4 + $0x30] sm:$0xff]
      %v449 = vld [vmem:[%s4 + $0x38] sm:$0xff]
      %v450 = vld [vmem:[%s4 + $0x40] sm:$0xff]
      %v451 = vld [vmem:[%s4 + $0x48] sm:$0xff]
      %v452 = vld [vmem:[%s4 + $0x50] sm:$0xff]
      %v453 = vld [vmem:[%s4 + $0x58] sm:$0xff]
      %v454 = vld [vmem:[%s4 + $0x60] sm:$0xff]
      %v455 = vld [vmem:[%s4 + $0x68] sm:$0xff]
      %v456 = vld [vmem:[%s4 + $0x70] sm:$0xff]
      %v457 = vld [vmem:[%s4 + $0x78] sm:$0xff]
      %v458 = vld [vmem:[#allocation3 + $0x1] sm:$0xff]
      %v459 = vld [vmem:[#allocation3 + $0x9] sm:$0xff]
      %s460 = scalar_lea.vmem %s4, 128
      %v461 = vld [vmem:[%s460] sm:$0xff]
      %v462 = vld [vmem:[%s460 + $0x8] sm:$0xff]
      %v463 = vld [vmem:[%s460 + $0x10] sm:$0xff]
      %v464 = vld [vmem:[%s460 + $0x18] sm:$0xff]
      %v465 = vld [vmem:[%s460 + $0x20] sm:$0xff]
      %v466 = vld [vmem:[%s460 + $0x28] sm:$0xff]
      %v467 = vld [vmem:[%s460 + $0x30] sm:$0xff]
      %v468 = vld [vmem:[%s460 + $0x38] sm:$0xff]
      %v469 = vld [vmem:[%s460 + $0x40] sm:$0xff]
      %v470 = vld [vmem:[%s460 + $0x48] sm:$0xff]
      %v471 = vld [vmem:[%s460 + $0x50] sm:$0xff]
      %v472 = vld [vmem:[%s460 + $0x58] sm:$0xff]
      %v473 = vld [vmem:[%s460 + $0x60] sm:$0xff]
      %v474 = vld [vmem:[%s460 + $0x68] sm:$0xff]
      %v475 = vld [vmem:[%s460 + $0x70] sm:$0xff]
      %v476 = vld [vmem:[%s460 + $0x78] sm:$0xff]
      %477 = vmatpush.msra.mxu0 %v476
      %478 = vmatpush.msra.mxu0 %v475
      %479 = vmatpush.msra.mxu0 %v474
      %480 = vmatpush.msra.mxu0 %v473
      %481 = vmatpush.msra.mxu0 %v472
      %482 = vmatpush.msra.mxu0 %v471
      %483 = vmatpush.msra.mxu0 %v470
      %484 = vmatpush.msra.mxu0 %v469
      %485 = vmatpush.msra.mxu0 %v468
      %486 = vmatpush.msra.mxu0 %v467
      %487 = vmatpush.msra.mxu0 %v466
      %488 = vmatpush.msra.mxu0 %v465
      %489 = vmatpush.msra.mxu0 %v464
      %490 = vmatpush.msra.mxu0 %v463
      %491 = vmatpush.msra.mxu0 %v462
      %492 = vmatpush.msra.mxu0 %v461
      %493 = vmatmul.f32.gmra.mxu0 %v458
      %v494 = vpop.f32.mrf.mxu0
      %v495 = vadd.f32 0.0, %v494
      %496 = vmatmul.f32.gmra.mxu0 %v459
      %v497 = vpop.f32.mrf.mxu0
      %v498 = vadd.f32 0.0, %v497
      %499 = vdwg.mxu0
      %500 = vmatpush.msra.mxu0 %v457
      %501 = vmatpush.msra.mxu0 %v456
      %502 = vmatpush.msra.mxu0 %v455
      %503 = vmatpush.msra.mxu0 %v454
      %504 = vmatpush.msra.mxu0 %v453
      %505 = vmatpush.msra.mxu0 %v452
      %506 = vmatpush.msra.mxu0 %v451
      %507 = vmatpush.msra.mxu0 %v450
      %508 = vmatpush.msra.mxu0 %v449
      %509 = vmatpush.msra.mxu0 %v448
      %510 = vmatpush.msra.mxu0 %v447
      %511 = vmatpush.msra.mxu0 %v446
      %512 = vmatpush.msra.mxu0 %v445
      %513 = vmatpush.msra.mxu0 %v444
      %514 = vmatpush.msra.mxu0 %v443
      %515 = vmatpush.msra.mxu0 %v442
      %516 = vmatmul.f32.gmra.mxu0 %v440
      %v517 = vpop.f32.mrf.mxu0
      %v518 = vadd.f32 %v495, %v517
      %519 = vmatmul.f32.gmra.mxu0 %v441
      %v520 = vpop.f32.mrf.mxu0
      %v521 = vadd.f32 %v498, %v520
      %522 = vdwg.mxu0
      %v523 = vld [vmem:[#allocation3 + $0x2] sm:$0xff]
      %v524 = vld [vmem:[#allocation3 + $0xa] sm:$0xff]
      %s525 = scalar_lea.vmem %s4, 256
      %v526 = vld [vmem:[%s525] sm:$0xff]
      %v527 = vld [vmem:[%s525 + $0x8] sm:$0xff]
      %v528 = vld [vmem:[%s525 + $0x10] sm:$0xff]
      %v529 = vld [vmem:[%s525 + $0x18] sm:$0xff]
      %v530 = vld [vmem:[%s525 + $0x20] sm:$0xff]
      %v531 = vld [vmem:[%s525 + $0x28] sm:$0xff]
      %v532 = vld [vmem:[%s525 + $0x30] sm:$0xff]
      %v533 = vld [vmem:[%s525 + $0x38] sm:$0xff]
      %v534 = vld [vmem:[%s525 + $0x40] sm:$0xff]
      %v535 = vld [vmem:[%s525 + $0x48] sm:$0xff]
      %v536 = vld [vmem:[%s525 + $0x50] sm:$0xff]
      %v537 = vld [vmem:[%s525 + $0x58] sm:$0xff]
      %v538 = vld [vmem:[%s525 + $0x60] sm:$0xff]
      %v539 = vld [vmem:[%s525 + $0x68] sm:$0xff]
      %v540 = vld [vmem:[%s525 + $0x70] sm:$0xff]
      %v541 = vld [vmem:[%s525 + $0x78] sm:$0xff]
      %542 = vmatpush.msra.mxu0 %v541
      %543 = vmatpush.msra.mxu0 %v540
      %544 = vmatpush.msra.mxu0 %v539
      %545 = vmatpush.msra.mxu0 %v538
      %546 = vmatpush.msra.mxu0 %v537
      %547 = vmatpush.msra.mxu0 %v536
      %548 = vmatpush.msra.mxu0 %v535
      %549 = vmatpush.msra.mxu0 %v534
      %550 = vmatpush.msra.mxu0 %v533
      %551 = vmatpush.msra.mxu0 %v532
      %552 = vmatpush.msra.mxu0 %v531
      %553 = vmatpush.msra.mxu0 %v530
      %554 = vmatpush.msra.mxu0 %v529
      %555 = vmatpush.msra.mxu0 %v528
      %556 = vmatpush.msra.mxu0 %v527
      %557 = vmatpush.msra.mxu0 %v526
      %558 = vmatmul.f32.gmra.mxu0 %v523
      %v559 = vpop.f32.mrf.mxu0
      %v560 = vadd.f32 0.0, %v559
      %561 = vmatmul.f32.gmra.mxu0 %v524
      %v562 = vpop.f32.mrf.mxu0
      %v563 = vadd.f32 0.0, %v562
      %564 = vdwg.mxu0
      %v565 = vadd.f32 %v518, %v560
      %v566 = vadd.f32 %v521, %v563
      %v567 = vld [vmem:[%s5] sm:$0x1]
      %v569 = vperm.slane %v567, 0
      %v571 = vmul.f32 %v565, %v569
      %v572 = vmul.f32 %v566, %v569
      %v573 = vld [vmem:[%s6] sm:$0x1]
      %v575 = vperm.slane %v573, 0
      %v577 = vadd.f32 %v571, %v575
      %v578 = vadd.f32 %v572, %v575
      %v579 = vmax.f32 %v577, 0.0
      %v580 = vmax.f32 %v578, 0.0
      %581 = vst [vmem:[%s278] sm:$0xff] %v579
      %582 = vst [vmem:[%s278 + $0x8] sm:$0xff] %v580
      %p583 = scmp.lt.s32.totalorder %s18, 1
      %s584 = scalar_select %p583, %s18, 1
      %s585 = smul.addr %s584, 2
      %s586 = smul.addr %s585, 8
      %s587 = scalar_lea.vmem %s7, %s586
      // Predicated region
      $region49: #{down_block_forward.1} parent=47 // pred_check
        %p588 = pneg %p188
      $region50: #{down_block_forward.1} parent=47 // pred_check_branch
        %590 = sbr.rel (%p588) target = $region52
      $region51: #{down_block_forward.1} parent=47 // pred_region
        _
      $region52: #{down_block_forward.1} parent=47 // pred_fallthru
        _
    $region48: #{down_block_forward.1} parent=5 // pred_fallthru
      _
    %p591 = scmp.le.s32.totalorder 2, %s13
    // Predicated region
    $region53: #{down_block_forward.1} parent=5 // pred_check
      %p592 = pneg %p591
    $region54: #{down_block_forward.1} parent=5 // pred_check_branch
      %594 = sbr.rel (%p592) target = $region56
    $region55: #{down_block_forward.1} parent=5 // pred_region
      %s595 = ssub.s32 %s13, 2
      // Predicated region
      $region57: #{down_block_forward.1} parent=55 // pred_check
        %p596 = pneg %p194
      $region58: #{down_block_forward.1} parent=55 // pred_check_branch
        %598 = sbr.rel (%p596) target = $region60
      $region59: #{down_block_forward.1} parent=55 // pred_region
        %p599 = scmp.lt.s32.totalorder %s19, 1
        %s600 = scalar_select %p599, %s19, 1
        %s601 = smul.addr %s600, 2
        %s602 = smul.addr %s601, 8
        %s603 = scalar_lea.vmem %s7, %s602
      $region60: #{down_block_forward.1} parent=55 // pred_fallthru
        _
    $region56: #{down_block_forward.1} parent=5 // pred_fallthru
      _
  $region6: #{down_block_forward.1} parent=0 // loop_footer
    %s17 = sadd.s32 1, %s13
  $region7: #{down_block_forward.1} parent=0 // loop_footer_branch
    %12 = sbr.rel target = $region3
  $region8: #{down_block_forward.1} parent=0 // loop_exit
    _

</llo_original>
